<compile_context>
chip_gen: v7x
topology: tpu7x:2x2x1
jax: 0.10.0
libtpu: 0.0.40
codegen_flags: <defaults>
</compile_context>

<pallas_src>
import functools

import jax
import jax.numpy as jnp
from jax.experimental import pallas as pl
from jax.experimental.pallas import tpu as pltpu


_MAX_BLOCK_ROWS = 2048
_MiB = 1024 * 1024


# ----------------------------------------------------------------------------
# Hardware queries (fail-safe: conservative defaults if queries are missing).
# ----------------------------------------------------------------------------
@functools.lru_cache(maxsize=None)
def _vmem_capacity_bytes() -> int:
    try:
        cap = int(pltpu.get_tpu_info().vmem_capacity_bytes)
        if cap > 0:
            return cap
    except Exception:
        pass
    try:
        kind = jax.devices()[0].device_kind.lower()
        if any(t in kind for t in ("v5", "v6")):
            return 128 * _MiB
    except Exception:
        pass
    return 64 * _MiB  # conservative: v7x per-TensorCore VMEM


@functools.lru_cache(maxsize=None)
def _has_native_bf16_vpu() -> bool:
    # v6e/v7x have bf16 VALU/EUP; v5e and older do not -> keep f32 math there.
    try:
        kind = jax.devices()[0].device_kind.lower()
    except Exception:
        return False
    return not any(t in kind for t in ("v2", "v3", "v4", "v5"))


# ----------------------------------------------------------------------------
# Kernel body (handles gated/ungated, packed/unpacked, f32/bf16-gate variants
# via static Python flags bound with functools.partial).
# ----------------------------------------------------------------------------
def _rmsnorm_kernel(*refs, eps: float, gated: bool, packed: bool,
                    low_precision: bool, inv_d: float):
    o_ref = refs[-1]
    x_ref = refs[0]
    z_ref = refs[1] if gated else None
    w_ref = refs[2] if gated else refs[1]
    m_ref = (refs[3] if gated else refs[2]) if packed else None

    x = x_ref[...]
    if gated:
        z = z_ref[...]
        if low_precision:
            # bf16 gate on bf16-native VPU/EUP (v6e/v7x): halves f32 temps.
            xg = x * (z * jax.nn.sigmoid(z))
        else:
            xf = x.astype(jnp.float32)
            zf = z.astype(jnp.float32)
            xg = xf * (zf * jax.nn.sigmoid(zf))
    else:
        xg = x if low_precision else x.astype(jnp.float32)

    # Mean-of-squares always accumulates in f32 for numerics.
    xf32 = xg.astype(jnp.float32)
    sq = xf32 * xf32
    if packed:
        # Segmented per-head mean via a tiny block-diagonal matmul on the
        # otherwise-idle MXU; every lane receives its own head's mean, so the
        # store below stays full-lane.
        ms = jnp.dot(sq, m_ref[...],
                     preferred_element_type=jnp.float32,
                     precision=jax.lax.Precision.HIGHEST)
    else:
        # sum * (1/d): VALU multiply instead of a divide on the reduction.
        ms = jnp.sum(sq, axis=-1, keepdims=True) * inv_d

    inv = jax.lax.rsqrt(ms + eps)

    if low_precision:
        o_ref[...] = (xg * inv.astype(xg.dtype)
                      * w_ref[...].astype(xg.dtype)).astype(o_ref.dtype)
    else:
        o_ref[...] = (xf32 * inv
                      * w_ref[...].astype(jnp.float32)).astype(o_ref.dtype)


# ----------------------------------------------------------------------------
# Tile sizing
# ----------------------------------------------------------------------------
def _choose_block_rows(n_rows: int, lane_w: int, itemsize: int,
                       n_streams: int, dma_budget: int, sub: int) -> int:
    """Largest sublane-aligned row tile within the double-buffered DMA budget."""
    per_row = 2 * n_streams * lane_w * itemsize  # 2x for double buffering
    tr = dma_budget // max(per_row, 1)
    tr = max(sub, min(_MAX_BLOCK_ROWS, (tr // sub) * sub))
    n_up = -(-n_rows // sub) * sub
    tr = min(tr, n_up)
    # Guarantee >= 2 grid steps when there is enough work, so the ("parallel",)
    # row axis can shard across the two v7x TensorCores.
    if tr >= n_rows and n_rows >= 2 * sub:
        half = -(-((n_rows + 1) // 2) // sub) * sub
        tr = min(tr, half)
    return max(tr, sub)


# ----------------------------------------------------------------------------
# Wrapper
# ----------------------------------------------------------------------------
def rmsnorm(x, weight, z=None, eps: float = 1e-5, block_rows: int | None = None):
    """Gated RMSNorm matching the PyTorch module's forward semantics.

    x: (..., d)   z: optional (..., d)   weight: (d,)
    Returns array with same shape/dtype as x.
    """
    orig_shape = x.shape
    d = int(orig_shape[-1])
    n = 1
    for s in orig_shape[:-1]:
        n *= int(s)

    itemsize = jnp.dtype(x.dtype).itemsize
    sub = max(8, 32 // itemsize)                 # 8 f32 / 16 bf16 / 32 int8
    n_streams = 3 if z is not None else 2        # row-tiled arrays: x[, z], out
    gated = z is not None
    low_prec = _has_native_bf16_vpu() and jnp.dtype(x.dtype) == jnp.dtype(jnp.bfloat16)

    # Lane-dense packing for small d (Mamba group-norm head dims 32/64).
    packed = (d < 128) and (128 % d == 0)
    if packed:
        G = 128 // d
        n_pad = -(-n // G) * G
        rows = n_pad // G
        lane_w = G * d                           # == 128
    else:
        G, n_pad, rows, lane_w = 1, n, n, d

    # ---- operand preparation (wrapper-side layout plumbing only) ----
    x2 = x.reshape(n, d)
    z2 = z.reshape(n, d) if gated else None
    if packed:
        if n_pad != n:
            pad = ((0, n_pad - n), (0, 0))       # zero pad -> finite rsqrt(eps)
            x2 = jnp.pad(x2, pad)
            if gated:
                z2 = jnp.pad(z2, pad)
        x2 = x2.reshape(rows, lane_w)
        if gated:
            z2 = z2.reshape(rows, lane_w)
        w2 = jnp.tile(weight.reshape(1, d), (1, G))
        lane_ids = jnp.arange(lane_w, dtype=jnp.int32) // d
        seg = (lane_ids[:, None] == lane_ids[None, :]).astype(jnp.float32) * (1.0 / d)
    else:
        w2 = weight.reshape(1, d)
        seg = None

    # ---- generation-aware DMA budget & scoped-VMEM cap ----
    vmem_cap = _vmem_capacity_bytes()
    dma_budget = 28 * _MiB if vmem_cap >= 96 * _MiB else 12 * _MiB
    vmem_cap_limit = max((vmem_cap * 3) // 4, 32 * _MiB)   # 96 MiB v5e/v6e, 48 MiB v7x

    if block_rows is None:
        tr = _choose_block_rows(rows, lane_w, itemsize, n_streams, dma_budget, sub)
    else:
        tr = max(sub, (int(block_rows) // sub) * sub)
        tr = min(tr, -(-rows // sub) * sub)

    # Clamp the tile so (double-buffered DMA + f32 temps + residents) always
    # fits under the cap -> graceful shrink instead of a compile-time VMEM OOM.
    f32_temps = 2 if low_prec else 3
    per_row_bytes = 2 * n_streams * lane_w * itemsize + f32_temps * lane_w * 4
    resident = 2 * lane_w * itemsize + lane_w * 4 + (lane_w * lane_w * 4 if packed else 0)
    slack = 4 * _MiB
    fit_rows = (vmem_cap_limit - resident - slack) // max(per_row_bytes, 1)
    fit_rows = max(sub, (fit_rows // sub) * sub)
    tr = min(tr, fit_rows)

    vmem_limit = tr * per_row_bytes + resident + slack
    vmem_limit = int(min(max(vmem_limit, 16 * _MiB), vmem_cap_limit))

    # ---- grid / specs ----
    # cdiv grid: the padded tail block may read garbage rows; rsqrt on them can
    # be non-finite but those rows' writes are masked off, so valid outputs are
    # unaffected.
    grid = (pl.cdiv(rows, tr),)
    row_spec = pl.BlockSpec((tr, lane_w), lambda i: (i, 0))
    w_spec = pl.BlockSpec((1, lane_w), lambda i: (0, 0))      # stays VMEM-resident
    in_specs = [row_spec] + ([row_spec] if gated else []) + [w_spec]
    args = [x2] + ([z2] if gated else []) + [w2]
    if packed:
        in_specs.append(pl.BlockSpec((lane_w, lane_w), lambda i: (0, 0)))
        args.append(seg)

    kernel = functools.partial(
        _rmsnorm_kernel, eps=float(eps), gated=gated, packed=packed,
        low_precision=low_prec, inv_d=1.0 / float(d))

    out = pl.pallas_call(
        kernel,
        out_shape=jax.ShapeDtypeStruct((rows, lane_w), x.dtype),
        grid=grid,
        in_specs=in_specs,
        out_specs=row_spec,
        compiler_params=pltpu.CompilerParams(
            dimension_semantics=("parallel",),
            vmem_limit_bytes=vmem_limit,
        ),
    )(*args)

    if packed:
        out = out.reshape(n_pad, d)[:n]
    return out.reshape(orig_shape)


# ----------------------------------------------------------------------------
# Pure-JAX reference
# ----------------------------------------------------------------------------
def _ref_rmsnorm(x, weight, z=None, eps: float = 1e-5):
    x = x.astype(jnp.float32)
    if z is not None:
        z = z.astype(jnp.float32)
        x = x * (z * jax.nn.sigmoid(z))
    inv = jax.lax.rsqrt(jnp.mean(x * x, axis=-1, keepdims=True) + eps)
    return x * inv * weight.astype(jnp.float32)


if __name__ == "__main__":
    key = jax.random.PRNGKey(0)
    kx, kz, kr, kw = jax.random.split(key, 4)

    batch, seq, d = 2, 8, 32
    x = jax.random.normal(kx, (batch, seq, d), dtype=jnp.float32)
    z = jax.random.normal(kz, (batch, seq, d), dtype=jnp.float32)
    weight = jnp.ones((d,), dtype=jnp.float32)   # module init: weight = ones(d)

    # 1) Gated, small-d lane-dense path (d=32 -> G=4 heads per 128-lane block).
    out_gated = rmsnorm(x, weight, z=z, eps=1e-5)
    jax.block_until_ready(out_gated)

    # 2) Ungated, same packed path.
    out_plain = rmsnorm(x, weight, z=None, eps=1e-5)
    jax.block_until_ready(out_plain)

    # 3) Ragged row count: exercises the cdiv grid + padded tail block.
    xr = jax.random.normal(kr, (3, 5, d), dtype=jnp.float32)  # n = 15 rows
    out_ragged = rmsnorm(xr, weight, z=None, eps=1e-5, block_rows=8)
    jax.block_until_ready(out_ragged)

    # 4) Large-d (unpacked) path with a 2-step parallel grid, d multiple of 128.
    d_big = 256
    xb = jax.random.normal(kx, (batch, seq, d_big), dtype=jnp.float32)
    zb = jax.random.normal(kz, (batch, seq, d_big), dtype=jnp.float32)
    wb = jnp.ones((d_big,), dtype=jnp.float32)
    out_big = rmsnorm(xb, wb, z=zb, eps=1e-5)
    jax.block_until_ready(out_big)

    # 5) bf16 inputs: bf16 gate / f32 accumulation on v6e/v7x, f32 elsewhere.
    x16 = x.astype(jnp.bfloat16)
    z16 = z.astype(jnp.bfloat16)
    out_bf16 = rmsnorm(x16, weight, z=z16, eps=1e-5)
    jax.block_until_ready(out_bf16)

    # Numerical checks against the pure-JAX reference.
    assert jnp.allclose(out_gated, _ref_rmsnorm(x, weight, z=z), atol=1e-5, rtol=1e-5)
    assert jnp.allclose(out_plain, _ref_rmsnorm(x, weight), atol=1e-5, rtol=1e-5)
    assert jnp.allclose(out_ragged, _ref_rmsnorm(xr, weight), atol=1e-5, rtol=1e-5)
    assert jnp.allclose(out_big, _ref_rmsnorm(xb, wb, z=zb), atol=1e-5, rtol=1e-5)
    ref_bf16 = _ref_rmsnorm(x16.astype(jnp.float32), weight, z=z16.astype(jnp.float32))
    assert jnp.allclose(out_bf16.astype(jnp.float32), ref_bf16, atol=5e-2, rtol=5e-2)

    print("KERNEL_OK")
</pallas_src>

<mosaic_0001>
module attributes {stable_mosaic.version = 11 : i64} {
  func.func @_rmsnorm_kernel(%arg0: i32, %arg1: memref<8x128xf32, #tpu.memory_space<vmem>>, %arg2: memref<8x128xf32, #tpu.memory_space<vmem>>, %arg3: memref<1x128xf32, #tpu.memory_space<vmem>>, %arg4: memref<128x128xf32, #tpu.memory_space<vmem>>, %arg5: memref<8x128xf32, #tpu.memory_space<vmem>>) attributes {dimension_semantics = [#tpu.dimension_semantics<parallel>], iteration_bounds = array<i64: 1>, scalar_prefetch = 0 : i64, scratch_operands = 0 : i64, tpu.core_type = #tpu.core_type<tc>, window_params = [{transform_indices = @transform_0, window_bounds = array<i64: 8, 128>}, {transform_indices = @transform_1, window_bounds = array<i64: 8, 128>}, {pipeline_mode = #tpu.pipeline_mode<synchronous>, transform_indices = @transform_2, window_bounds = array<i64: 1, 128>}, {pipeline_mode = #tpu.pipeline_mode<synchronous>, transform_indices = @transform_3, window_bounds = array<i64: 128, 128>}, {transform_indices = @transform_4, window_bounds = array<i64: 8, 128>}]} {
    %c0 = arith.constant 0 : index
    %c0_0 = arith.constant 0 : index
    %0 = vector.load %arg1[%c0, %c0_0] : memref<8x128xf32, #tpu.memory_space<vmem>>, vector<8x128xf32>
    %c0_1 = arith.constant 0 : index
    %c0_2 = arith.constant 0 : index
    %1 = vector.load %arg2[%c0_1, %c0_2] : memref<8x128xf32, #tpu.memory_space<vmem>>, vector<8x128xf32>
    %2 = arith.negf %1 : vector<8x128xf32>
    %3 = math.exp %2 : vector<8x128xf32>
    %cst = arith.constant 1.000000e+00 : f32
    %4 = vector.broadcast %cst : f32 to vector<8x128xf32>
    %5 = arith.addf %4, %3 : vector<8x128xf32>
    %6 = arith.divf %4, %5 : vector<8x128xf32>
    %7 = arith.mulf %1, %6 : vector<8x128xf32>
    %8 = arith.mulf %0, %7 : vector<8x128xf32>
    %9 = arith.mulf %8, %8 : vector<8x128xf32>
    %c0_3 = arith.constant 0 : index
    %c0_4 = arith.constant 0 : index
    %10 = vector.load %arg4[%c0_3, %c0_4] : memref<128x128xf32, #tpu.memory_space<vmem>>, vector<128x128xf32>
    %cst_5 = arith.constant dense<0.000000e+00> : vector<8x128xf32>
    %11 = tpu.matmul %9, %10, %cst_5 {dimension_numbers = #tpu.dot_dimension_numbers<[1], [0], [0], [1], [0, 0, 1, 1], [], []>, precision = #tpu.contract_precision<fp32>} : vector<8x128xf32>, vector<128x128xf32>, vector<8x128xf32> -> vector<8x128xf32>
    %cst_6 = arith.constant 9.99999974E-6 : f32
    %12 = vector.broadcast %cst_6 : f32 to vector<8x128xf32>
    %13 = arith.addf %11, %12 : vector<8x128xf32>
    %14 = math.rsqrt %13 : vector<8x128xf32>
    %15 = arith.mulf %8, %14 : vector<8x128xf32>
    %c0_7 = arith.constant 0 : index
    %c0_8 = arith.constant 0 : index
    %16 = vector.load %arg3[%c0_7, %c0_8] : memref<1x128xf32, #tpu.memory_space<vmem>>, vector<1x128xf32>
    %17 = vector.broadcast %16 : vector<1x128xf32> to vector<8x128xf32>
    %18 = arith.mulf %15, %17 : vector<8x128xf32>
    %c0_9 = arith.constant 0 : index
    %c0_10 = arith.constant 0 : index
    %19 = vector.load %arg5[%c0_9, %c0_10] : memref<8x128xf32, #tpu.memory_space<vmem>>, vector<8x128xf32>
    tpu.vector_store %arg5[%c0_9, %c0_10], %18 {strides = array<i32>} : memref<8x128xf32, #tpu.memory_space<vmem>>, vector<8x128xf32>,
    return
  }
  func.func @transform_0(%arg0: i32) -> (i32, i32) {
    %c0_i32 = arith.constant 0 : i32
    %c0_i32_0 = arith.constant 0 : i32
    return %arg0, %c0_i32 : i32, i32
  }
  func.func @transform_1(%arg0: i32) -> (i32, i32) {
    %c0_i32 = arith.constant 0 : i32
    %c0_i32_0 = arith.constant 0 : i32
    return %arg0, %c0_i32 : i32, i32
  }
  func.func @transform_2(%arg0: i32) -> (i32, i32) {
    %c0_i32 = arith.constant 0 : i32
    %c0_i32_0 = arith.constant 0 : i32
    %c0_i32_1 = arith.constant 0 : i32
    return %c0_i32, %c0_i32_0 : i32, i32
  }
  func.func @transform_3(%arg0: i32) -> (i32, i32) {
    %c0_i32 = arith.constant 0 : i32
    %c0_i32_0 = arith.constant 0 : i32
    %c0_i32_1 = arith.constant 0 : i32
    return %c0_i32, %c0_i32_0 : i32, i32
  }
  func.func @transform_4(%arg0: i32) -> (i32, i32) {
    %c0_i32 = arith.constant 0 : i32
    %c0_i32_0 = arith.constant 0 : i32
    return %arg0, %c0_i32 : i32, i32
  }
}

</mosaic_0001>

<llo_original>
// kernel: tpu_custom_call.1
$region0: #{tpu_custom_call.1}
  #allocation0 [shape = 'u32[]', space=smem, size = 0x4, offset = 0x4, fixed_abs, tag = 'smem constant byte address 0x4 - core index']
  #allocation1 [shape = 'u32[144,128]{1,0:T(1,128)}', space=vmem, size = 0x12000, scoped, tag = 'internal scratch']
  %s0 = inlined_call_operand.hbm [shape: f32[4,128], index: 0, kind: input, shape index: {}]
  %s1 = inlined_call_operand.hbm [shape: f32[4,128], index: 1, kind: input, shape index: {}]
  %s2 = inlined_call_operand.vmem [shape: f32[1,128], index: 2, kind: input, shape index: {}]
  %s3 = inlined_call_operand.hbm [shape: f32[128,128], index: 3, kind: input, shape index: {}]
  %s4 = inlined_call_operand.hbm [shape: f32[4,128], index: 4, kind: output, shape index: {}]
  %s5 = sld [smem:[#allocation0]]
  $region38: #{tpu_custom_call.1} parent=0
    _
  %s7 = ssub.s32 1, %s5
  %s8 = scalar_select 0, %s7, %s5
  $region1: #{tpu_custom_call.1} parent=0
    #allocation2 [shape = 'u8[4096]{0}', space=vmem, size = 0x1000, scoped, tag = 'input window, operand 0, single buffered']
    #allocation3 [shape = 's32[1]{0}', space=sflag, size = 0x4, scoped, tag = 'scoped memory for tpu_custom_call.1']
    #allocation4 [shape = 's32[1]{0}', space=sflag, size = 0x4, scoped, tag = 'scoped memory for tpu_custom_call.1']
    #allocation5 [shape = 'u8[4096]{0}', space=vmem, size = 0x1000, scoped, tag = 'input window, operand 1, single buffered']
    #allocation6 [shape = 's32[1]{0}', space=sflag, size = 0x4, scoped, tag = 'scoped memory for tpu_custom_call.1']
    #allocation7 [shape = 'u8[65536]{0}', space=vmem, size = 0x10000, scoped, tag = 'input window, operand 3, single buffered']
    #allocation8 [shape = 'u8[4096]{0}', space=vmem, size = 0x1000, scoped, tag = 'output window, operand 0, single buffered']
    %9 = vsyncpa [#allocation3], 0
    %10 = vsyncpa [#allocation6], 0
    %11 = vsyncpa [#allocation4], 0
    // Predicated region
    $region2: #{tpu_custom_call.1} parent=1 // pred_check
      _
    $region3: #{tpu_custom_call.1} parent=1 // pred_check_branch
      %13 = sbr.rel (0) target = $region5
    $region4: #{tpu_custom_call.1} parent=1 // pred_region
      %s15 = ssub.s32 128, 64
      %16 = vsyncadd [#allocation3], %s15
      %s17 = sshll.u32 [#allocation2], 4
      %s18 = int_to_ptr.vmem [resolvable:$true] %s17
      %23 = dma.hbm_to_vmem [thread:$0]  %s0, 64, %s18, [#allocation3], 64, 64, 4
    $region5: #{tpu_custom_call.1} parent=1 // pred_fallthru
      _
    // Predicated region
    $region6: #{tpu_custom_call.1} parent=1 // pred_check
      _
    $region7: #{tpu_custom_call.1} parent=1 // pred_check_branch
      %25 = sbr.rel (0) target = $region9
    $region8: #{tpu_custom_call.1} parent=1 // pred_region
      %s27 = ssub.s32 128, 64
      %28 = vsyncadd [#allocation6], %s27
      %s29 = sshll.u32 [#allocation5], 4
      %s30 = int_to_ptr.vmem [resolvable:$true] %s29
      %35 = dma.hbm_to_vmem [thread:$0]  %s1, 64, %s30, [#allocation6], 64, 64, 4
    $region9: #{tpu_custom_call.1} parent=1 // pred_fallthru
      _
    // Predicated region
    $region10: #{tpu_custom_call.1} parent=1 // pred_check
      _
    $region11: #{tpu_custom_call.1} parent=1 // pred_check_branch
      %37 = sbr.rel (0) target = $region13
    $region12: #{tpu_custom_call.1} parent=1 // pred_region
      _
    $region13: #{tpu_custom_call.1} parent=1 // pred_fallthru
      _
    // Predicated region
    $region14: #{tpu_custom_call.1} parent=1 // pred_check
      _
    $region15: #{tpu_custom_call.1} parent=1 // pred_check_branch
      %39 = sbr.rel (0) target = $region17
    $region16: #{tpu_custom_call.1} parent=1 // pred_region
      %s41 = ssub.s32 2048, 2048
      %42 = vsyncadd [#allocation6], %s41
      %s43 = sshll.u32 [#allocation7], 4
      %s44 = int_to_ptr.vmem [resolvable:$true] %s43
      %49 = dma.hbm_to_vmem [thread:$0]  %s3, 2048, %s44, [#allocation6], 128, 128, 8
    $region17: #{tpu_custom_call.1} parent=1 // pred_fallthru
      _
    // Predicated region
    $region18: #{tpu_custom_call.1} parent=1 // pred_check
      _
    $region19: #{tpu_custom_call.1} parent=1 // pred_check_branch
      %51 = sbr.rel (0) target = $region21
    $region20: #{tpu_custom_call.1} parent=1 // pred_region
      %52 = dma.done [#allocation3], 128
    $region21: #{tpu_custom_call.1} parent=1 // pred_fallthru
      _
    // Predicated region
    $region22: #{tpu_custom_call.1} parent=1 // pred_check
      _
    $region23: #{tpu_custom_call.1} parent=1 // pred_check_branch
      %54 = sbr.rel (0) target = $region25
    $region24: #{tpu_custom_call.1} parent=1 // pred_region
      %55 = dma.done [#allocation6], 128
    $region25: #{tpu_custom_call.1} parent=1 // pred_fallthru
      _
    // Predicated region
    $region26: #{tpu_custom_call.1} parent=1 // pred_check
      _
    $region27: #{tpu_custom_call.1} parent=1 // pred_check_branch
      %57 = sbr.rel (0) target = $region29
    $region28: #{tpu_custom_call.1} parent=1 // pred_region
      %58 = dma.done [#allocation6], 2048
    $region29: #{tpu_custom_call.1} parent=1 // pred_fallthru
      _
    %v59 = vld [vmem:[#allocation2] sm:$0xff]
    %v60 = vld [vmem:[#allocation5] sm:$0xff]
    %v61 = vxor.u32 %v60, 2147483648
    %v62 = vmul.f32 %v61, 1.442695
    %v63 = vpow.pop %v62
    %v64 = vadd.f32 %v63, 1.0
    %v65 = vrcp.pop %v64
    %v66 = vmul.f32 1.0, %v65
    %v67 = vmul.f32 %v60, %v66
    %v68 = vmul.f32 %v59, %v67
    %v69 = vmul.f32 %v68, %v68
    %v70 = vld [vmem:[#allocation7] sm:$0xff]
    %v71 = vld [vmem:[#allocation7 + $0x8] sm:$0xff]
    %v72 = vld [vmem:[#allocation7 + $0x10] sm:$0xff]
    %v73 = vld [vmem:[#allocation7 + $0x18] sm:$0xff]
    %v74 = vld [vmem:[#allocation7 + $0x20] sm:$0xff]
    %v75 = vld [vmem:[#allocation7 + $0x28] sm:$0xff]
    %v76 = vld [vmem:[#allocation7 + $0x30] sm:$0xff]
    %v77 = vld [vmem:[#allocation7 + $0x38] sm:$0xff]
    %v78 = vld [vmem:[#allocation7 + $0x40] sm:$0xff]
    %v79 = vld [vmem:[#allocation7 + $0x48] sm:$0xff]
    %v80 = vld [vmem:[#allocation7 + $0x50] sm:$0xff]
    %v81 = vld [vmem:[#allocation7 + $0x58] sm:$0xff]
    %v82 = vld [vmem:[#allocation7 + $0x60] sm:$0xff]
    %v83 = vld [vmem:[#allocation7 + $0x68] sm:$0xff]
    %v84 = vld [vmem:[#allocation7 + $0x70] sm:$0xff]
    %v85 = vld [vmem:[#allocation7 + $0x78] sm:$0xff]
    %86 = vmatprep.subr.mxu0 0.0
    %v87 = vand.u32 %v70, 4294901760
    %88 = vmatpush1.msra.mxu0 %v87
    %89 = vmatprep.subr.mxu0 0.0
    %v90 = vand.u32 %v71, 4294901760
    %91 = vmatpush1.msra.mxu0 %v90
    %92 = vmatprep.subr.mxu0 0.0
    %v93 = vand.u32 %v72, 4294901760
    %94 = vmatpush1.msra.mxu0 %v93
    %95 = vmatprep.subr.mxu0 0.0
    %v96 = vand.u32 %v73, 4294901760
    %97 = vmatpush1.msra.mxu0 %v96
    %98 = vmatprep.subr.mxu0 0.0
    %v99 = vand.u32 %v74, 4294901760
    %100 = vmatpush1.msra.mxu0 %v99
    %101 = vmatprep.subr.mxu0 0.0
    %v102 = vand.u32 %v75, 4294901760
    %103 = vmatpush1.msra.mxu0 %v102
    %104 = vmatprep.subr.mxu0 0.0
    %v105 = vand.u32 %v76, 4294901760
    %106 = vmatpush1.msra.mxu0 %v105
    %107 = vmatprep.subr.mxu0 0.0
    %v108 = vand.u32 %v77, 4294901760
    %109 = vmatpush1.msra.mxu0 %v108
    %110 = vmatprep.subr.mxu0 0.0
    %v111 = vand.u32 %v78, 4294901760
    %112 = vmatpush1.msra.mxu0 %v111
    %113 = vmatprep.subr.mxu0 0.0
    %v114 = vand.u32 %v79, 4294901760
    %115 = vmatpush1.msra.mxu0 %v114
    %116 = vmatprep.subr.mxu0 0.0
    %v117 = vand.u32 %v80, 4294901760
    %118 = vmatpush1.msra.mxu0 %v117
    %119 = vmatprep.subr.mxu0 0.0
    %v120 = vand.u32 %v81, 4294901760
    %121 = vmatpush1.msra.mxu0 %v120
    %122 = vmatprep.subr.mxu0 0.0
    %v123 = vand.u32 %v82, 4294901760
    %124 = vmatpush1.msra.mxu0 %v123
    %125 = vmatprep.subr.mxu0 0.0
    %v126 = vand.u32 %v83, 4294901760
    %127 = vmatpush1.msra.mxu0 %v126
    %128 = vmatprep.subr.mxu0 0.0
    %v129 = vand.u32 %v84, 4294901760
    %130 = vmatpush1.msra.mxu0 %v129
    %131 = vmatprep.subr.mxu0 0.0
    %v132 = vand.u32 %v85, 4294901760
    %133 = vmatpush1.msra.mxu0 %v132
    %134 = vmatprep.subr.mxu0 0.0
    %135 = vmatpush1.msra.mxu0 0.0
    %136 = vmatprep.subr.mxu0 0.0
    %137 = vmatpush1.msra.mxu0 0.0
    %138 = vmatprep.subr.mxu0 0.0
    %139 = vmatpush1.msra.mxu0 0.0
    %140 = vmatprep.subr.mxu0 0.0
    %141 = vmatpush1.msra.mxu0 0.0
    %142 = vmatprep.subr.mxu0 0.0
    %143 = vmatpush1.msra.mxu0 0.0
    %144 = vmatprep.subr.mxu0 0.0
    %145 = vmatpush1.msra.mxu0 0.0
    %146 = vmatprep.subr.mxu0 0.0
    %147 = vmatpush1.msra.mxu0 0.0
    %148 = vmatprep.subr.mxu0 0.0
    %149 = vmatpush1.msra.mxu0 0.0
    %150 = vmatprep.subr.mxu0 0.0
    %151 = vmatpush1.msra.mxu0 0.0
    %152 = vmatprep.subr.mxu0 0.0
    %153 = vmatpush1.msra.mxu0 0.0
    %154 = vmatprep.subr.mxu0 0.0
    %155 = vmatpush1.msra.mxu0 0.0
    %156 = vmatprep.subr.mxu0 0.0
    %157 = vmatpush1.msra.mxu0 0.0
    %158 = vmatprep.subr.mxu0 0.0
    %159 = vmatpush1.msra.mxu0 0.0
    %160 = vmatprep.subr.mxu0 0.0
    %161 = vmatpush1.msra.mxu0 0.0
    %162 = vmatprep.subr.mxu0 0.0
    %163 = vmatpush1.msra.mxu0 0.0
    %164 = vmatprep.subr.mxu0 0.0
    %165 = vmatpush1.msra.mxu0 0.0
    %166 = vmatprep.mubr.f32.mxu0 0.0
    %v167 = vand.u32 %v69, 4294901760
    %v168 = vsub.f32 %v69, %v167
    %v169 = vand.u32 %v168, 4294901760
    %v170 = vsub.f32 %v168, %v169
    %v171 = vand.u32 %v170, 4294901760
    %172 = vmatmul.mubr.f32.gmra.mrb[0].mxu0 %v171
    %v173 = vpop.f32.mrb[0].mxu0
    %v174 = vadd.f32 1e-05, %v173
    %v175 = vpop.f32.mrb[0].mxu0
    %176 = vdwg.mxu0
    %177 = vmatprep.subr.mxu0 0.0
    %v178 = vand.u32 %v70, 4294901760
    %v179 = vsub.f32 %v70, %v178
    %v180 = vand.u32 %v179, 4294901760
    %v181 = vsub.f32 %v179, %v180
    %v182 = vand.u32 %v181, 4294901760
    %183 = vmatpush1.msra.mxu0 %v182
    %184 = vmatprep.subr.mxu0 0.0
    %v185 = vand.u32 %v71, 4294901760
    %v186 = vsub.f32 %v71, %v185
    %v187 = vand.u32 %v186, 4294901760
    %v188 = vsub.f32 %v186, %v187
    %v189 = vand.u32 %v188, 4294901760
    %190 = vmatpush1.msra.mxu0 %v189
    %191 = vmatprep.subr.mxu0 0.0
    %v192 = vand.u32 %v72, 4294901760
    %v193 = vsub.f32 %v72, %v192
    %v194 = vand.u32 %v193, 4294901760
    %v195 = vsub.f32 %v193, %v194
    %v196 = vand.u32 %v195, 4294901760
    %197 = vmatpush1.msra.mxu0 %v196
    %198 = vmatprep.subr.mxu0 0.0
    %v199 = vand.u32 %v73, 4294901760
    %v200 = vsub.f32 %v73, %v199
    %v201 = vand.u32 %v200, 4294901760
    %v202 = vsub.f32 %v200, %v201
    %v203 = vand.u32 %v202, 4294901760
    %204 = vmatpush1.msra.mxu0 %v203
    %205 = vmatprep.subr.mxu0 0.0
    %v206 = vand.u32 %v74, 4294901760
    %v207 = vsub.f32 %v74, %v206
    %v208 = vand.u32 %v207, 4294901760
    %v209 = vsub.f32 %v207, %v208
    %v210 = vand.u32 %v209, 4294901760
    %211 = vmatpush1.msra.mxu0 %v210
    %212 = vmatprep.subr.mxu0 0.0
    %v213 = vand.u32 %v75, 4294901760
    %v214 = vsub.f32 %v75, %v213
    %v215 = vand.u32 %v214, 4294901760
    %v216 = vsub.f32 %v214, %v215
    %v217 = vand.u32 %v216, 4294901760
    %218 = vmatpush1.msra.mxu0 %v217
    %219 = vmatprep.subr.mxu0 0.0
    %v220 = vand.u32 %v76, 4294901760
    %v221 = vsub.f32 %v76, %v220
    %v222 = vand.u32 %v221, 4294901760
    %v223 = vsub.f32 %v221, %v222
    %v224 = vand.u32 %v223, 4294901760
    %225 = vmatpush1.msra.mxu0 %v224
    %226 = vmatprep.subr.mxu0 0.0
    %v227 = vand.u32 %v77, 4294901760
    %v228 = vsub.f32 %v77, %v227
    %v229 = vand.u32 %v228, 4294901760
    %v230 = vsub.f32 %v228, %v229
    %v231 = vand.u32 %v230, 4294901760
    %232 = vmatpush1.msra.mxu0 %v231
    %233 = vmatprep.subr.mxu0 0.0
    %v234 = vand.u32 %v78, 4294901760
    %v235 = vsub.f32 %v78, %v234
    %v236 = vand.u32 %v235, 4294901760
    %v237 = vsub.f32 %v235, %v236
    %v238 = vand.u32 %v237, 4294901760
    %239 = vmatpush1.msra.mxu0 %v238
    %240 = vmatprep.subr.mxu0 0.0
    %v241 = vand.u32 %v79, 4294901760
    %v242 = vsub.f32 %v79, %v241
    %v243 = vand.u32 %v242, 4294901760
    %v244 = vsub.f32 %v242, %v243
    %v245 = vand.u32 %v244, 4294901760
    %246 = vmatpush1.msra.mxu0 %v245
    %247 = vmatprep.subr.mxu0 0.0
    %v248 = vand.u32 %v80, 4294901760
    %v249 = vsub.f32 %v80, %v248
    %v250 = vand.u32 %v249, 4294901760
    %v251 = vsub.f32 %v249, %v250
    %v252 = vand.u32 %v251, 4294901760
    %253 = vmatpush1.msra.mxu0 %v252
    %254 = vmatprep.subr.mxu0 0.0
    %v255 = vand.u32 %v81, 4294901760
    %v256 = vsub.f32 %v81, %v255
    %v257 = vand.u32 %v256, 4294901760
    %v258 = vsub.f32 %v256, %v257
    %v259 = vand.u32 %v258, 4294901760
    %260 = vmatpush1.msra.mxu0 %v259
    %261 = vmatprep.subr.mxu0 0.0
    %v262 = vand.u32 %v82, 4294901760
    %v263 = vsub.f32 %v82, %v262
    %v264 = vand.u32 %v263, 4294901760
    %v265 = vsub.f32 %v263, %v264
    %v266 = vand.u32 %v265, 4294901760
    %267 = vmatpush1.msra.mxu0 %v266
    %268 = vmatprep.subr.mxu0 0.0
    %v269 = vand.u32 %v83, 4294901760
    %v270 = vsub.f32 %v83, %v269
    %v271 = vand.u32 %v270, 4294901760
    %v272 = vsub.f32 %v270, %v271
    %v273 = vand.u32 %v272, 4294901760
    %274 = vmatpush1.msra.mxu0 %v273
    %275 = vmatprep.subr.mxu0 0.0
    %v276 = vand.u32 %v84, 4294901760
    %v277 = vsub.f32 %v84, %v276
    %v278 = vand.u32 %v277, 4294901760
    %v279 = vsub.f32 %v277, %v278
    %v280 = vand.u32 %v279, 4294901760
    %281 = vmatpush1.msra.mxu0 %v280
    %282 = vmatprep.subr.mxu0 0.0
    %v283 = vand.u32 %v85, 4294901760
    %v284 = vsub.f32 %v85, %v283
    %v285 = vand.u32 %v284, 4294901760
    %v286 = vsub.f32 %v284, %v285
    %v287 = vand.u32 %v286, 4294901760
    %288 = vmatpush1.msra.mxu0 %v287
    %289 = vmatprep.subr.mxu0 0.0
    %290 = vmatpush1.msra.mxu0 0.0
    %291 = vmatprep.subr.mxu0 0.0
    %292 = vmatpush1.msra.mxu0 0.0
    %293 = vmatprep.subr.mxu0 0.0
    %294 = vmatpush1.msra.mxu0 0.0
    %295 = vmatprep.subr.mxu0 0.0
    %296 = vmatpush1.msra.mxu0 0.0
    %297 = vmatprep.subr.mxu0 0.0
    %298 = vmatpush1.msra.mxu0 0.0
    %299 = vmatprep.subr.mxu0 0.0
    %300 = vmatpush1.msra.mxu0 0.0
    %301 = vmatprep.subr.mxu0 0.0
    %302 = vmatpush1.msra.mxu0 0.0
    %303 = vmatprep.subr.mxu0 0.0
    %304 = vmatpush1.msra.mxu0 0.0
    %305 = vmatprep.subr.mxu0 0.0
    %306 = vmatpush1.msra.mxu0 0.0
    %307 = vmatprep.subr.mxu0 0.0
    %308 = vmatpush1.msra.mxu0 0.0
    %309 = vmatprep.subr.mxu0 0.0
    %310 = vmatpush1.msra.mxu0 0.0
    %311 = vmatprep.subr.mxu0 0.0
    %312 = vmatpush1.msra.mxu0 0.0
    %313 = vmatprep.subr.mxu0 0.0
    %314 = vmatpush1.msra.mxu0 0.0
    %315 = vmatprep.subr.mxu0 0.0
    %316 = vmatpush1.msra.mxu0 0.0
    %317 = vmatprep.subr.mxu0 0.0
    %318 = vmatpush1.msra.mxu0 0.0
    %319 = vmatprep.subr.mxu0 0.0
    %320 = vmatpush1.msra.mxu0 0.0
    %321 = vmatprep.mubr.f32.mxu0 0.0
    %v322 = vand.u32 %v69, 4294901760
    %323 = vmatmul.mubr.f32.gmra.mrb[0].mxu0 %v322
    %v324 = vpop.f32.mrb[0].mxu0
    %v325 = vadd.f32 %v174, %v324
    %v326 = vpop.f32.mrb[0].mxu0
    %327 = vdwg.mxu0
    %328 = vmatprep.subr.mxu0 0.0
    %v329 = vand.u32 %v70, 4294901760
    %v330 = vsub.f32 %v70, %v329
    %331 = vmatpush1.msra.mxu0 %v330
    %332 = vmatprep.subr.mxu0 0.0
    %v333 = vand.u32 %v71, 4294901760
    %v334 = vsub.f32 %v71, %v333
    %335 = vmatpush1.msra.mxu0 %v334
    %336 = vmatprep.subr.mxu0 0.0
    %v337 = vand.u32 %v72, 4294901760
    %v338 = vsub.f32 %v72, %v337
    %339 = vmatpush1.msra.mxu0 %v338
    %340 = vmatprep.subr.mxu0 0.0
    %v341 = vand.u32 %v73, 4294901760
    %v342 = vsub.f32 %v73, %v341
    %343 = vmatpush1.msra.mxu0 %v342
    %344 = vmatprep.subr.mxu0 0.0
    %v345 = vand.u32 %v74, 4294901760
    %v346 = vsub.f32 %v74, %v345
    %347 = vmatpush1.msra.mxu0 %v346
    %348 = vmatprep.subr.mxu0 0.0
    %v349 = vand.u32 %v75, 4294901760
    %v350 = vsub.f32 %v75, %v349
    %351 = vmatpush1.msra.mxu0 %v350
    %352 = vmatprep.subr.mxu0 0.0
    %v353 = vand.u32 %v76, 4294901760
    %v354 = vsub.f32 %v76, %v353
    %355 = vmatpush1.msra.mxu0 %v354
    %356 = vmatprep.subr.mxu0 0.0
    %v357 = vand.u32 %v77, 4294901760
    %v358 = vsub.f32 %v77, %v357
    %359 = vmatpush1.msra.mxu0 %v358
    %360 = vmatprep.subr.mxu0 0.0
    %v361 = vand.u32 %v78, 4294901760
    %v362 = vsub.f32 %v78, %v361
    %363 = vmatpush1.msra.mxu0 %v362
    %364 = vmatprep.subr.mxu0 0.0
    %v365 = vand.u32 %v79, 4294901760
    %v366 = vsub.f32 %v79, %v365
    %367 = vmatpush1.msra.mxu0 %v366
    %368 = vmatprep.subr.mxu0 0.0
    %v369 = vand.u32 %v80, 4294901760
    %v370 = vsub.f32 %v80, %v369
    %371 = vmatpush1.msra.mxu0 %v370
    %372 = vmatprep.subr.mxu0 0.0
    %v373 = vand.u32 %v81, 4294901760
    %v374 = vsub.f32 %v81, %v373
    %375 = vmatpush1.msra.mxu0 %v374
    %376 = vmatprep.subr.mxu0 0.0
    %v377 = vand.u32 %v82, 4294901760
    %v378 = vsub.f32 %v82, %v377
    %379 = vmatpush1.msra.mxu0 %v378
    %380 = vmatprep.subr.mxu0 0.0
    %v381 = vand.u32 %v83, 4294901760
    %v382 = vsub.f32 %v83, %v381
    %383 = vmatpush1.msra.mxu0 %v382
    %384 = vmatprep.subr.mxu0 0.0
    %v385 = vand.u32 %v84, 4294901760
    %v386 = vsub.f32 %v84, %v385
    %387 = vmatpush1.msra.mxu0 %v386
    %388 = vmatprep.subr.mxu0 0.0
    %v389 = vand.u32 %v85, 4294901760
    %v390 = vsub.f32 %v85, %v389
    %391 = vmatpush1.msra.mxu0 %v390
    %392 = vmatprep.subr.mxu0 0.0
    %393 = vmatpush1.msra.mxu0 0.0
    %394 = vmatprep.subr.mxu0 0.0
    %395 = vmatpush1.msra.mxu0 0.0
    %396 = vmatprep.subr.mxu0 0.0
    %397 = vmatpush1.msra.mxu0 0.0
    %398 = vmatprep.subr.mxu0 0.0
    %399 = vmatpush1.msra.mxu0 0.0
    %400 = vmatprep.subr.mxu0 0.0
    %401 = vmatpush1.msra.mxu0 0.0
    %402 = vmatprep.subr.mxu0 0.0
    %403 = vmatpush1.msra.mxu0 0.0
    %404 = vmatprep.subr.mxu0 0.0
    %405 = vmatpush1.msra.mxu0 0.0
    %406 = vmatprep.subr.mxu0 0.0
    %407 = vmatpush1.msra.mxu0 0.0
    %408 = vmatprep.subr.mxu0 0.0
    %409 = vmatpush1.msra.mxu0 0.0
    %410 = vmatprep.subr.mxu0 0.0
    %411 = vmatpush1.msra.mxu0 0.0
    %412 = vmatprep.subr.mxu0 0.0
    %413 = vmatpush1.msra.mxu0 0.0
    %414 = vmatprep.subr.mxu0 0.0
    %415 = vmatpush1.msra.mxu0 0.0
    %416 = vmatprep.subr.mxu0 0.0
    %417 = vmatpush1.msra.mxu0 0.0
    %418 = vmatprep.subr.mxu0 0.0
    %419 = vmatpush1.msra.mxu0 0.0
    %420 = vmatprep.subr.mxu0 0.0
    %421 = vmatpush1.msra.mxu0 0.0
    %422 = vmatprep.subr.mxu0 0.0
    %423 = vmatpush1.msra.mxu0 0.0
    %424 = vmatprep.mubr.f32.mxu0 0.0
    %v425 = vand.u32 %v69, 4294901760
    %v426 = vsub.f32 %v69, %v425
    %427 = vmatmul.mubr.f32.gmra.mrb[0].mxu0 %v426
    %v428 = vpop.f32.mrb[0].mxu0
    %v429 = vadd.f32 %v325, %v428
    %v430 = vpop.f32.mrb[0].mxu0
    %431 = vdwg.mxu0
    %432 = vmatprep.subr.mxu0 0.0
    %v433 = vand.u32 %v70, 4294901760
    %434 = vmatpush1.msra.mxu0 %v433
    %435 = vmatprep.subr.mxu0 0.0
    %v436 = vand.u32 %v71, 4294901760
    %437 = vmatpush1.msra.mxu0 %v436
    %438 = vmatprep.subr.mxu0 0.0
    %v439 = vand.u32 %v72, 4294901760
    %440 = vmatpush1.msra.mxu0 %v439
    %441 = vmatprep.subr.mxu0 0.0
    %v442 = vand.u32 %v73, 4294901760
    %443 = vmatpush1.msra.mxu0 %v442
    %444 = vmatprep.subr.mxu0 0.0
    %v445 = vand.u32 %v74, 4294901760
    %446 = vmatpush1.msra.mxu0 %v445
    %447 = vmatprep.subr.mxu0 0.0
    %v448 = vand.u32 %v75, 4294901760
    %449 = vmatpush1.msra.mxu0 %v448
    %450 = vmatprep.subr.mxu0 0.0
    %v451 = vand.u32 %v76, 4294901760
    %452 = vmatpush1.msra.mxu0 %v451
    %453 = vmatprep.subr.mxu0 0.0
    %v454 = vand.u32 %v77, 4294901760
    %455 = vmatpush1.msra.mxu0 %v454
    %456 = vmatprep.subr.mxu0 0.0
    %v457 = vand.u32 %v78, 4294901760
    %458 = vmatpush1.msra.mxu0 %v457
    %459 = vmatprep.subr.mxu0 0.0
    %v460 = vand.u32 %v79, 4294901760
    %461 = vmatpush1.msra.mxu0 %v460
    %462 = vmatprep.subr.mxu0 0.0
    %v463 = vand.u32 %v80, 4294901760
    %464 = vmatpush1.msra.mxu0 %v463
    %465 = vmatprep.subr.mxu0 0.0
    %v466 = vand.u32 %v81, 4294901760
    %467 = vmatpush1.msra.mxu0 %v466
    %468 = vmatprep.subr.mxu0 0.0
    %v469 = vand.u32 %v82, 4294901760
    %470 = vmatpush1.msra.mxu0 %v469
    %471 = vmatprep.subr.mxu0 0.0
    %v472 = vand.u32 %v83, 4294901760
    %473 = vmatpush1.msra.mxu0 %v472
    %474 = vmatprep.subr.mxu0 0.0
    %v475 = vand.u32 %v84, 4294901760
    %476 = vmatpush1.msra.mxu0 %v475
    %477 = vmatprep.subr.mxu0 0.0
    %v478 = vand.u32 %v85, 4294901760
    %479 = vmatpush1.msra.mxu0 %v478
    %480 = vmatprep.subr.mxu0 0.0
    %481 = vmatpush1.msra.mxu0 0.0
    %482 = vmatprep.subr.mxu0 0.0
    %483 = vmatpush1.msra.mxu0 0.0
    %484 = vmatprep.subr.mxu0 0.0
    %485 = vmatpush1.msra.mxu0 0.0
    %486 = vmatprep.subr.mxu0 0.0
    %487 = vmatpush1.msra.mxu0 0.0
    %488 = vmatprep.subr.mxu0 0.0
    %489 = vmatpush1.msra.mxu0 0.0
    %490 = vmatprep.subr.mxu0 0.0
    %491 = vmatpush1.msra.mxu0 0.0
    %492 = vmatprep.subr.mxu0 0.0
    %493 = vmatpush1.msra.mxu0 0.0
    %494 = vmatprep.subr.mxu0 0.0
    %495 = vmatpush1.msra.mxu0 0.0
    %496 = vmatprep.subr.mxu0 0.0
    %497 = vmatpush1.msra.mxu0 0.0
    %498 = vmatprep.subr.mxu0 0.0
    %499 = vmatpush1.msra.mxu0 0.0
    %500 = vmatprep.subr.mxu0 0.0
    %501 = vmatpush1.msra.mxu0 0.0
    %502 = vmatprep.subr.mxu0 0.0
    %503 = vmatpush1.msra.mxu0 0.0
    %504 = vmatprep.subr.mxu0 0.0
    %505 = vmatpush1.msra.mxu0 0.0
    %506 = vmatprep.subr.mxu0 0.0
    %507 = vmatpush1.msra.mxu0 0.0
    %508 = vmatprep.subr.mxu0 0.0
    %509 = vmatpush1.msra.mxu0 0.0
    %510 = vmatprep.subr.mxu0 0.0
    %511 = vmatpush1.msra.mxu0 0.0
    %512 = vmatprep.mubr.f32.mxu0 0.0
    %v513 = vand.u32 %v69, 4294901760
    %v514 = vsub.f32 %v69, %v513
    %v515 = vand.u32 %v514, 4294901760
    %516 = vmatmul.mubr.f32.gmra.mrb[0].mxu0 %v515
    %v517 = vpop.f32.mrb[0].mxu0
    %v518 = vadd.f32 %v429, %v517
    %v519 = vpop.f32.mrb[0].mxu0
    %520 = vdwg.mxu0
    %521 = vmatprep.subr.mxu0 0.0
    %v522 = vand.u32 %v70, 4294901760
    %v523 = vsub.f32 %v70, %v522
    %v524 = vand.u32 %v523, 4294901760
    %525 = vmatpush1.msra.mxu0 %v524
    %526 = vmatprep.subr.mxu0 0.0
    %v527 = vand.u32 %v71, 4294901760
    %v528 = vsub.f32 %v71, %v527
    %v529 = vand.u32 %v528, 4294901760
    %530 = vmatpush1.msra.mxu0 %v529
    %531 = vmatprep.subr.mxu0 0.0
    %v532 = vand.u32 %v72, 4294901760
    %v533 = vsub.f32 %v72, %v532
    %v534 = vand.u32 %v533, 4294901760
    %535 = vmatpush1.msra.mxu0 %v534
    %536 = vmatprep.subr.mxu0 0.0
    %v537 = vand.u32 %v73, 4294901760
    %v538 = vsub.f32 %v73, %v537
    %v539 = vand.u32 %v538, 4294901760
    %540 = vmatpush1.msra.mxu0 %v539
    %541 = vmatprep.subr.mxu0 0.0
    %v542 = vand.u32 %v74, 4294901760
    %v543 = vsub.f32 %v74, %v542
    %v544 = vand.u32 %v543, 4294901760
    %545 = vmatpush1.msra.mxu0 %v544
    %546 = vmatprep.subr.mxu0 0.0
    %v547 = vand.u32 %v75, 4294901760
    %v548 = vsub.f32 %v75, %v547
    %v549 = vand.u32 %v548, 4294901760
    %550 = vmatpush1.msra.mxu0 %v549
    %551 = vmatprep.subr.mxu0 0.0
    %v552 = vand.u32 %v76, 4294901760
    %v553 = vsub.f32 %v76, %v552
    %v554 = vand.u32 %v553, 4294901760
    %555 = vmatpush1.msra.mxu0 %v554
    %556 = vmatprep.subr.mxu0 0.0
    %v557 = vand.u32 %v77, 4294901760
    %v558 = vsub.f32 %v77, %v557
    %v559 = vand.u32 %v558, 4294901760
    %560 = vmatpush1.msra.mxu0 %v559
    %561 = vmatprep.subr.mxu0 0.0
    %v562 = vand.u32 %v78, 4294901760
    %v563 = vsub.f32 %v78, %v562
    %v564 = vand.u32 %v563, 4294901760
    %565 = vmatpush1.msra.mxu0 %v564
    %566 = vmatprep.subr.mxu0 0.0
    %v567 = vand.u32 %v79, 4294901760
    %v568 = vsub.f32 %v79, %v567
    %v569 = vand.u32 %v568, 4294901760
    %570 = vmatpush1.msra.mxu0 %v569
    %571 = vmatprep.subr.mxu0 0.0
    %v572 = vand.u32 %v80, 4294901760
    %v573 = vsub.f32 %v80, %v572
    %v574 = vand.u32 %v573, 4294901760
    %575 = vmatpush1.msra.mxu0 %v574
    %576 = vmatprep.subr.mxu0 0.0
    %v577 = vand.u32 %v81, 4294901760
    %v578 = vsub.f32 %v81, %v577
    %v579 = vand.u32 %v578, 4294901760
    %580 = vmatpush1.msra.mxu0 %v579
    %581 = vmatprep.subr.mxu0 0.0
    %v582 = vand.u32 %v82, 4294901760
    %v583 = vsub.f32 %v82, %v582
    %v584 = vand.u32 %v583, 4294901760
    %585 = vmatpush1.msra.mxu0 %v584
    %586 = vmatprep.subr.mxu0 0.0
    %v587 = vand.u32 %v83, 4294901760
    %v588 = vsub.f32 %v83, %v587
    %v589 = vand.u32 %v588, 4294901760
    %590 = vmatpush1.msra.mxu0 %v589
    %591 = vmatprep.subr.mxu0 0.0
    %v592 = vand.u32 %v84, 4294901760
    %v593 = vsub.f32 %v84, %v592
    %v594 = vand.u32 %v593, 4294901760
    %595 = vmatpush1.msra.mxu0 %v594
    %596 = vmatprep.subr.mxu0 0.0
    %v597 = vand.u32 %v85, 4294901760
    %v598 = vsub.f32 %v85, %v597
    %v599 = vand.u32 %v598, 4294901760
    %600 = vmatpush1.msra.mxu0 %v599
    %601 = vmatprep.subr.mxu0 0.0
    %602 = vmatpush1.msra.mxu0 0.0
    %603 = vmatprep.subr.mxu0 0.0
    %604 = vmatpush1.msra.mxu0 0.0
    %605 = vmatprep.subr.mxu0 0.0
    %606 = vmatpush1.msra.mxu0 0.0
    %607 = vmatprep.subr.mxu0 0.0
    %608 = vmatpush1.msra.mxu0 0.0
    %609 = vmatprep.subr.mxu0 0.0
    %610 = vmatpush1.msra.mxu0 0.0
    %611 = vmatprep.subr.mxu0 0.0
    %612 = vmatpush1.msra.mxu0 0.0
    %613 = vmatprep.subr.mxu0 0.0
    %614 = vmatpush1.msra.mxu0 0.0
    %615 = vmatprep.subr.mxu0 0.0
    %616 = vmatpush1.msra.mxu0 0.0
    %617 = vmatprep.subr.mxu0 0.0
    %618 = vmatpush1.msra.mxu0 0.0
    %619 = vmatprep.subr.mxu0 0.0
    %620 = vmatpush1.msra.mxu0 0.0
    %621 = vmatprep.subr.mxu0 0.0
    %622 = vmatpush1.msra.mxu0 0.0
    %623 = vmatprep.subr.mxu0 0.0
    %624 = vmatpush1.msra.mxu0 0.0
    %625 = vmatprep.subr.mxu0 0.0
    %626 = vmatpush1.msra.mxu0 0.0
    %627 = vmatprep.subr.mxu0 0.0
    %628 = vmatpush1.msra.mxu0 0.0
    %629 = vmatprep.subr.mxu0 0.0
    %630 = vmatpush1.msra.mxu0 0.0
    %631 = vmatprep.subr.mxu0 0.0
    %632 = vmatpush1.msra.mxu0 0.0
    %633 = vmatprep.mubr.f32.mxu0 0.0
    %v634 = vand.u32 %v69, 4294901760
    %635 = vmatmul.mubr.f32.gmra.mrb[0].mxu0 %v634
    %v636 = vpop.f32.mrb[0].mxu0
    %v637 = vadd.f32 %v518, %v636
    %v638 = vpop.f32.mrb[0].mxu0
    %639 = vdwg.mxu0
    %640 = vmatprep.subr.mxu0 0.0
    %v641 = vand.u32 %v70, 4294901760
    %642 = vmatpush1.msra.mxu0 %v641
    %643 = vmatprep.subr.mxu0 0.0
    %v644 = vand.u32 %v71, 4294901760
    %645 = vmatpush1.msra.mxu0 %v644
    %646 = vmatprep.subr.mxu0 0.0
    %v647 = vand.u32 %v72, 4294901760
    %648 = vmatpush1.msra.mxu0 %v647
    %649 = vmatprep.subr.mxu0 0.0
    %v650 = vand.u32 %v73, 4294901760
    %651 = vmatpush1.msra.mxu0 %v650
    %652 = vmatprep.subr.mxu0 0.0
    %v653 = vand.u32 %v74, 4294901760
    %654 = vmatpush1.msra.mxu0 %v653
    %655 = vmatprep.subr.mxu0 0.0
    %v656 = vand.u32 %v75, 4294901760
    %657 = vmatpush1.msra.mxu0 %v656
    %658 = vmatprep.subr.mxu0 0.0
    %v659 = vand.u32 %v76, 4294901760
    %660 = vmatpush1.msra.mxu0 %v659
    %661 = vmatprep.subr.mxu0 0.0
    %v662 = vand.u32 %v77, 4294901760
    %663 = vmatpush1.msra.mxu0 %v662
    %664 = vmatprep.subr.mxu0 0.0
    %v665 = vand.u32 %v78, 4294901760
    %666 = vmatpush1.msra.mxu0 %v665
    %667 = vmatprep.subr.mxu0 0.0
    %v668 = vand.u32 %v79, 4294901760
    %669 = vmatpush1.msra.mxu0 %v668
    %670 = vmatprep.subr.mxu0 0.0
    %v671 = vand.u32 %v80, 4294901760
    %672 = vmatpush1.msra.mxu0 %v671
    %673 = vmatprep.subr.mxu0 0.0
    %v674 = vand.u32 %v81, 4294901760
    %675 = vmatpush1.msra.mxu0 %v674
    %676 = vmatprep.subr.mxu0 0.0
    %v677 = vand.u32 %v82, 4294901760
    %678 = vmatpush1.msra.mxu0 %v677
    %679 = vmatprep.subr.mxu0 0.0
    %v680 = vand.u32 %v83, 4294901760
    %681 = vmatpush1.msra.mxu0 %v680
    %682 = vmatprep.subr.mxu0 0.0
    %v683 = vand.u32 %v84, 4294901760
    %684 = vmatpush1.msra.mxu0 %v683
    %685 = vmatprep.subr.mxu0 0.0
    %v686 = vand.u32 %v85, 4294901760
    %687 = vmatpush1.msra.mxu0 %v686
    %688 = vmatprep.subr.mxu0 0.0
    %689 = vmatpush1.msra.mxu0 0.0
    %690 = vmatprep.subr.mxu0 0.0
    %691 = vmatpush1.msra.mxu0 0.0
    %692 = vmatprep.subr.mxu0 0.0
    %693 = vmatpush1.msra.mxu0 0.0
    %694 = vmatprep.subr.mxu0 0.0
    %695 = vmatpush1.msra.mxu0 0.0
    %696 = vmatprep.subr.mxu0 0.0
    %697 = vmatpush1.msra.mxu0 0.0
    %698 = vmatprep.subr.mxu0 0.0
    %699 = vmatpush1.msra.mxu0 0.0
    %700 = vmatprep.subr.mxu0 0.0
    %701 = vmatpush1.msra.mxu0 0.0
    %702 = vmatprep.subr.mxu0 0.0
    %703 = vmatpush1.msra.mxu0 0.0
    %704 = vmatprep.subr.mxu0 0.0
    %705 = vmatpush1.msra.mxu0 0.0
    %706 = vmatprep.subr.mxu0 0.0
    %707 = vmatpush1.msra.mxu0 0.0
    %708 = vmatprep.subr.mxu0 0.0
    %709 = vmatpush1.msra.mxu0 0.0
    %710 = vmatprep.subr.mxu0 0.0
    %711 = vmatpush1.msra.mxu0 0.0
    %712 = vmatprep.subr.mxu0 0.0
    %713 = vmatpush1.msra.mxu0 0.0
    %714 = vmatprep.subr.mxu0 0.0
    %715 = vmatpush1.msra.mxu0 0.0
    %716 = vmatprep.subr.mxu0 0.0
    %717 = vmatpush1.msra.mxu0 0.0
    %718 = vmatprep.subr.mxu0 0.0
    %719 = vmatpush1.msra.mxu0 0.0
    %720 = vmatprep.mubr.f32.mxu0 0.0
    %v721 = vand.u32 %v69, 4294901760
    %722 = vmatmul.mubr.f32.gmra.mrb[0].mxu0 %v721
    %v723 = vpop.f32.mrb[0].mxu0
    %v724 = vadd.f32 %v637, %v723
    %v725 = vpop.f32.mrb[0].mxu0
    %726 = vdwg.mxu0
    %v727 = vrsqrt.pop %v724
    %v728 = vmul.f32 %v68, %v727
    %v729 = vld [vmem:[%s2] sm:$0x1]
    %v731 = vlaneseq
    %v732 = vshrl.u32 %v731, 7
    %v733 = vsub.s32 0, %v732
    %v734 = vrot.slane %v729, %v733
    %v736 = vmul.f32 %v728, %v734
    %737 = vst [vmem:[#allocation8] sm:$0xff] %v736
    // Predicated region
    $region30: #{tpu_custom_call.1} parent=1 // pred_check
      _
    $region31: #{tpu_custom_call.1} parent=1 // pred_check_branch
      %739 = sbr.rel (0) target = $region33
    $region32: #{tpu_custom_call.1} parent=1 // pred_region
      %s741 = ssub.s32 128, 64
      %742 = vsyncadd [#allocation4], %s741
      %s743 = sshll.u32 [#allocation8], 4
      %s744 = int_to_ptr.vmem [resolvable:$true] %s743
      %749 = dma.vmem_to_hbm [thread:$0]  %s744, 64, %s4, [#allocation4], 64, 64, 4
    $region33: #{tpu_custom_call.1} parent=1 // pred_fallthru
      _
    // Predicated region
    $region34: #{tpu_custom_call.1} parent=1 // pred_check
      _
    $region35: #{tpu_custom_call.1} parent=1 // pred_check_branch
      %751 = sbr.rel (0) target = $region37
    $region36: #{tpu_custom_call.1} parent=1 // pred_region
      %752 = dma.done [#allocation4], 128
    $region37: #{tpu_custom_call.1} parent=1 // pred_fallthru
      _
    %753 = vsyncpa [#allocation3], 1
    %754 = vsyncpa [#allocation6], 1
    %755 = vsyncpa [#allocation4], 1

</llo_original>
